<compile_context>
chip_gen: v6e
topology: v6e:2x2x1
jax: 0.10.0
libtpu: 0.0.40
codegen_flags: <defaults>
</compile_context>

<pallas_src>
import functools

import jax
import jax.numpy as jnp
from jax.experimental import pallas as pl
from jax.experimental.pallas import tpu as pltpu

_LANES = 128
_SMALL_N = 64 * 1024            # below this, plain jnp beats a Pallas launch
_MAX_TILE_ROWS_SINGLE = 8192    # 4 MiB f32 block -> 8 MiB double-buffered
_MAX_TILE_ROWS_FUSED = 4096     # two input streams -> 2 * 2 * 2 MiB = 8 MiB


def _round_up(x, m):
    return -(-x // m) * m


def _pick_tiling(rows, max_tile_rows):
    """Row-tile size (multiple of 8) and tile count (>= 2 for v7x megacore)."""
    tile_rows = min(max_tile_rows, _round_up(pl.cdiv(rows, 2), 8))
    tile_rows = max(tile_rows, 8)
    num_tiles = pl.cdiv(rows, tile_rows)
    return tile_rows, num_tiles


# -----------------------------------------------------------------------------
# Kernels
# -----------------------------------------------------------------------------
def _hinge_single_kernel(x_ref, out_ref, *, sign, need_sum, tile_rows,
                         valid_rows_last):
    """Per-row-tile partials.

    out block (1, n_out, 128):
      row 0 = per-lane sum(relu(1 + sign * x))
      row 1 = per-lane sum(x)                    (only when need_sum)
    """
    t = pl.program_id(0)
    last = pl.num_programs(0) - 1

    def emit(x):
        x = x.astype(jnp.float32)
        hinge = jnp.maximum(1.0 + sign * x, 0.0)
        out_ref[0, 0, :] = jnp.sum(hinge, axis=0)
        if need_sum:
            out_ref[0, 1, :] = jnp.sum(x, axis=0)

    if valid_rows_last == tile_rows:
        # Grid divides the rows evenly: no masking anywhere.
        emit(x_ref[...])
    else:
        # Only the last tile pays for zeroing its stale (out-of-bounds) rows.
        # Each zeroed element contributes exactly 1.0 to the hinge sum; that
        # constant is subtracted in the wrapper.
        @pl.when(t != last)
        def _():
            emit(x_ref[...])

        @pl.when(t == last)
        def _():
            x = x_ref[...]
            row = jax.lax.broadcasted_iota(jnp.int32, x.shape, 0)
            emit(jnp.where(row < valid_rows_last, x, 0.0))


def _hinge_fused_kernel(real_ref, fake_ref, out_ref, *, tile_rows,
                        valid_rows_last):
    """Fused real/fake per-row-tile partials.

    out block (1, 3, 128):
      row 0 = per-lane sum(relu(1 - real))
      row 1 = per-lane sum(relu(1 + fake))
      row 2 = per-lane sum(fake)
    """
    t = pl.program_id(0)
    last = pl.num_programs(0) - 1

    def emit(real, fake):
        real = real.astype(jnp.float32)
        fake = fake.astype(jnp.float32)
        out_ref[0, 0, :] = jnp.sum(jnp.maximum(1.0 - real, 0.0), axis=0)
        out_ref[0, 1, :] = jnp.sum(jnp.maximum(1.0 + fake, 0.0), axis=0)
        out_ref[0, 2, :] = jnp.sum(fake, axis=0)

    if valid_rows_last == tile_rows:
        emit(real_ref[...], fake_ref[...])
    else:
        @pl.when(t != last)
        def _():
            emit(real_ref[...], fake_ref[...])

        @pl.when(t == last)
        def _():
            row = jax.lax.broadcasted_iota(jnp.int32, real_ref.shape, 0)
            valid = row < valid_rows_last
            emit(jnp.where(valid, real_ref[...], 0.0),
                 jnp.where(valid, fake_ref[...], 0.0))


# -----------------------------------------------------------------------------
# Wrappers
# -----------------------------------------------------------------------------
def _plain_sums(x, sign, need_sum):
    x = x.astype(jnp.float32)
    hinge = jnp.sum(jnp.maximum(1.0 + sign * x, 0.0))
    s = jnp.sum(x) if need_sum else None
    return hinge, s


def _as_slab(x):
    """Flat view + lane-dense (rows, 128) prefix view + remainder count."""
    n = int(x.size)
    flat = x.reshape(-1)
    rows = n // _LANES
    rem = n - rows * _LANES
    if rem:
        # Note: when n % 128 != 0 the prefix slice may materialize one copy;
        # unavoidable without an in-kernel 1-D gather, and the <128-element
        # tail is folded in with plain jnp.
        main = flat[: rows * _LANES].reshape(rows, _LANES)
    else:
        main = flat.reshape(rows, _LANES)   # pure bitcast, no HBM traffic
    return flat, main, rows, rem


def _hinge_sums(x, *, sign, need_sum):
    """(sum(relu(1 + sign*x)), sum(x) or None) over all elements of x."""
    n = int(x.size)
    if n < _SMALL_N:
        return _plain_sums(x, sign, need_sum)

    flat, main, rows, rem = _as_slab(x)
    tile_rows, num_tiles = _pick_tiling(rows, _MAX_TILE_ROWS_SINGLE)
    valid_rows_last = rows - (num_tiles - 1) * tile_rows
    pad_elems = (num_tiles * tile_rows - rows) * _LANES

    n_out = 2 if need_sum else 1
    kernel = functools.partial(
        _hinge_single_kernel, sign=float(sign), need_sum=need_sum,
        tile_rows=tile_rows, valid_rows_last=valid_rows_last)

    partials = pl.pallas_call(
        kernel,
        out_shape=jax.ShapeDtypeStruct((num_tiles, n_out, _LANES), jnp.float32),
        grid_spec=pl.GridSpec(
            grid=(num_tiles,),
            in_specs=[pl.BlockSpec((tile_rows, _LANES), lambda t: (t, 0))],
            out_specs=pl.BlockSpec((1, n_out, _LANES), lambda t: (t, 0, 0)),
        ),
        compiler_params=pltpu.CompilerParams(
            dimension_semantics=("parallel",)),
    )(main)

    sums = jnp.sum(partials, axis=(0, 2))                 # one fused reduce
    hinge = sums[0] - float(pad_elems)                    # zeroed rows add 1 each
    s = sums[1] if need_sum else None

    if rem:
        tail = flat[rows * _LANES:].astype(jnp.float32)
        hinge = hinge + jnp.sum(jnp.maximum(1.0 + sign * tail, 0.0))
        if need_sum:
            s = s + jnp.sum(tail)
    return hinge, s


def _hinge_fused(score_real, score_fake):
    """One pallas_call -> (sum relu(1-real), sum relu(1+fake), sum fake)."""
    flat_r, main_r, rows, rem = _as_slab(score_real)
    flat_f, main_f, _, _ = _as_slab(score_fake)

    tile_rows, num_tiles = _pick_tiling(rows, _MAX_TILE_ROWS_FUSED)
    valid_rows_last = rows - (num_tiles - 1) * tile_rows
    pad_elems = (num_tiles * tile_rows - rows) * _LANES

    kernel = functools.partial(
        _hinge_fused_kernel, tile_rows=tile_rows,
        valid_rows_last=valid_rows_last)

    partials = pl.pallas_call(
        kernel,
        out_shape=jax.ShapeDtypeStruct((num_tiles, 3, _LANES), jnp.float32),
        grid_spec=pl.GridSpec(
            grid=(num_tiles,),
            in_specs=[pl.BlockSpec((tile_rows, _LANES), lambda t: (t, 0)),
                      pl.BlockSpec((tile_rows, _LANES), lambda t: (t, 0))],
            out_specs=pl.BlockSpec((1, 3, _LANES), lambda t: (t, 0, 0)),
        ),
        compiler_params=pltpu.CompilerParams(
            dimension_semantics=("parallel",)),
    )(main_r, main_f)

    sums = jnp.sum(partials, axis=(0, 2))                 # (3,)
    hinge_real = sums[0] - float(pad_elems)
    hinge_fake = sums[1] - float(pad_elems)
    sum_fake = sums[2]

    if rem:
        tail_r = flat_r[rows * _LANES:].astype(jnp.float32)
        tail_f = flat_f[rows * _LANES:].astype(jnp.float32)
        hinge_real = hinge_real + jnp.sum(jnp.maximum(1.0 - tail_r, 0.0))
        hinge_fake = hinge_fake + jnp.sum(jnp.maximum(1.0 + tail_f, 0.0))
        sum_fake = sum_fake + jnp.sum(tail_f)
    return hinge_real, hinge_fake, sum_fake


def hinge_gan_losses(score_real, score_fake, weight=1.0):
    """Returns (generator_loss, discriminator_loss) as f32 scalars."""
    n_real = float(score_real.size)
    n_fake = float(score_fake.size)

    if score_real.shape == score_fake.shape and score_real.size >= _SMALL_N:
        hinge_real, hinge_fake, sum_fake = _hinge_fused(score_real, score_fake)
    else:
        hinge_real, _ = _hinge_sums(score_real, sign=-1.0, need_sum=False)
        hinge_fake, sum_fake = _hinge_sums(score_fake, sign=+1.0, need_sum=True)

    gen_loss = -(sum_fake / n_fake) * weight
    dis_loss = hinge_real / n_real + hinge_fake / n_fake
    return gen_loss, dis_loss


def accumulate_value(inputs, update):
    for k, v in update.items():
        if k in inputs:
            inputs[k] = inputs[k] + v
        else:
            inputs[k] = v
    return inputs


class HingeGan:
    """JAX/Pallas port of oobleck.losses.HingeGan (forward only)."""

    def __init__(self, real_key: str, fake_key: str, weight: float = 1.0):
        self.real_key = real_key
        self.fake_key = fake_key
        self.weight = weight

    def __call__(self, inputs):
        score_real = inputs[f"score_{self.real_key}"]
        score_fake = inputs[f"score_{self.fake_key}"]
        gen_loss, dis_loss = hinge_gan_losses(
            score_real, score_fake, weight=self.weight)
        inputs = accumulate_value(
            inputs,
            {"generator_loss": gen_loss, "discriminator_loss": dis_loss},
        )
        return inputs


# -----------------------------------------------------------------------------
# Demo / self-test
# -----------------------------------------------------------------------------
def _ref_losses(real, fake, weight):
    g = -jnp.mean(fake.astype(jnp.float32)) * weight
    d = (jnp.mean(jnp.maximum(1.0 - real.astype(jnp.float32), 0.0))
         + jnp.mean(jnp.maximum(1.0 + fake.astype(jnp.float32), 0.0)))
    return g, d


if __name__ == "__main__":
    key = jax.random.PRNGKey(0)
    k1, k2, k3, k4, k5 = jax.random.split(key, 5)

    # 1) Module-level demo at small discriminator-score shapes (fast path).
    score_real = jax.random.normal(k1, (2, 4, 16), dtype=jnp.float32)
    score_fake = jax.random.normal(k2, (2, 4, 16), dtype=jnp.float32)
    module = HingeGan(real_key="real", fake_key="fake", weight=1.0)
    out = module({"score_real": score_real, "score_fake": score_fake})
    gen = jax.block_until_ready(out["generator_loss"])
    dis = jax.block_until_ready(out["discriminator_loss"])
    g_ref, d_ref = _ref_losses(score_real, score_fake, 1.0)
    assert jnp.allclose(gen, g_ref, atol=1e-5, rtol=1e-5), (gen, g_ref)
    assert jnp.allclose(dis, d_ref, atol=1e-5, rtol=1e-5), (dis, d_ref)

    # 2) Fused Pallas path (matching shapes, ragged last row-tile).
    big_real = jax.random.normal(k3, (2, 1, 40000), dtype=jnp.float32)
    big_fake = jax.random.normal(k4, (2, 1, 40000), dtype=jnp.float32)
    g2, d2 = hinge_gan_losses(big_real, big_fake, weight=0.5)
    g2 = jax.block_until_ready(g2)
    d2 = jax.block_until_ready(d2)
    g2_ref, d2_ref = _ref_losses(big_real, big_fake, 0.5)
    assert jnp.allclose(g2, g2_ref, atol=1e-4, rtol=1e-5), (g2, g2_ref)
    assert jnp.allclose(d2, d2_ref, atol=1e-4, rtol=1e-5), (d2, d2_ref)

    # 3) Single-tensor Pallas path (mismatched shapes, n % 128 != 0 tail).
    big_fake2 = jax.random.normal(k5, (3, 1, 33333), dtype=jnp.float32)
    g3, d3 = hinge_gan_losses(big_real, big_fake2, weight=1.0)
    g3 = jax.block_until_ready(g3)
    d3 = jax.block_until_ready(d3)
    g3_ref, d3_ref = _ref_losses(big_real, big_fake2, 1.0)
    assert jnp.allclose(g3, g3_ref, atol=1e-4, rtol=1e-5), (g3, g3_ref)
    assert jnp.allclose(d3, d3_ref, atol=1e-4, rtol=1e-5), (d3, d3_ref)

    print("KERNEL_OK")
</pallas_src>

<mosaic_0001>
module attributes {stable_mosaic.version = 11 : i64} {
  func.func @_hinge_fused_kernel(%arg0: i32, %arg1: memref<320x128xf32, #tpu.memory_space<vmem>>, %arg2: memref<320x128xf32, #tpu.memory_space<vmem>>, %arg3: memref<1x3x128xf32, #tpu.memory_space<vmem>>) attributes {dimension_semantics = [#tpu.dimension_semantics<parallel>], iteration_bounds = array<i64: 2>, scalar_prefetch = 0 : i64, scratch_operands = 0 : i64, tpu.core_type = #tpu.core_type<tc>, window_params = [{transform_indices = @transform_0, window_bounds = array<i64: 320, 128>}, {transform_indices = @transform_1, window_bounds = array<i64: 320, 128>}, {transform_indices = @transform_2, window_bounds = array<i64: 1, 3, 128>}]} {
    %c1_i32 = arith.constant 1 : i32
    %0 = arith.cmpi ne, %arg0, %c1_i32 : i32
    %1 = arith.extui %0 : i1 to i32
    %c0_i32 = arith.constant 0 : i32
    %2 = arith.cmpi ne, %1, %c0_i32 : i32
    scf.if %2 {
      %c0 = arith.constant 0 : index
      %c0_2 = arith.constant 0 : index
      %6 = vector.load %arg1[%c0, %c0_2] : memref<320x128xf32, #tpu.memory_space<vmem>>, vector<320x128xf32>
      %c0_3 = arith.constant 0 : index
      %c0_4 = arith.constant 0 : index
      %7 = vector.load %arg2[%c0_3, %c0_4] : memref<320x128xf32, #tpu.memory_space<vmem>>, vector<320x128xf32>
      %cst = arith.constant 1.000000e+00 : f32
      %8 = vector.broadcast %cst : f32 to vector<320x128xf32>
      %9 = arith.subf %8, %6 : vector<320x128xf32>
      %cst_5 = arith.constant 0.000000e+00 : f32
      %10 = vector.broadcast %cst_5 : f32 to vector<320x128xf32>
      %11 = arith.maximumf %9, %10 : vector<320x128xf32>
      %cst_6 = arith.constant dense<0.000000e+00> : vector<128xf32>
      %12 = vector.multi_reduction <add>, %11, %cst_6 [0] : vector<320x128xf32> to vector<128xf32>
      %c0_7 = arith.constant 0 : index
      %c0_8 = arith.constant 0 : index
      %c0_9 = arith.constant 0 : index
      %13 = vector.load %arg3[%c0_7, %c0_8, %c0_9] : memref<1x3x128xf32, #tpu.memory_space<vmem>>, vector<1x1x128xf32>
      %14 = vector.shape_cast %13 : vector<1x1x128xf32> to vector<128xf32>
      %15 = vector.shape_cast %12 : vector<128xf32> to vector<1x1x128xf32>
      tpu.vector_store %arg3[%c0_7, %c0_8, %c0_9], %15 {strides = array<i32>} : memref<1x3x128xf32, #tpu.memory_space<vmem>>, vector<1x1x128xf32>,
      %cst_10 = arith.constant 1.000000e+00 : f32
      %16 = vector.broadcast %cst_10 : f32 to vector<320x128xf32>
      %17 = arith.addf %16, %7 : vector<320x128xf32>
      %cst_11 = arith.constant 0.000000e+00 : f32
      %18 = vector.broadcast %cst_11 : f32 to vector<320x128xf32>
      %19 = arith.maximumf %17, %18 : vector<320x128xf32>
      %cst_12 = arith.constant dense<0.000000e+00> : vector<128xf32>
      %20 = vector.multi_reduction <add>, %19, %cst_12 [0] : vector<320x128xf32> to vector<128xf32>
      %c0_13 = arith.constant 0 : index
      %c1 = arith.constant 1 : index
      %c0_14 = arith.constant 0 : index
      %21 = vector.load %arg3[%c0_13, %c1, %c0_14] : memref<1x3x128xf32, #tpu.memory_space<vmem>>, vector<1x1x128xf32>
      %22 = vector.shape_cast %21 : vector<1x1x128xf32> to vector<128xf32>
      %23 = vector.shape_cast %20 : vector<128xf32> to vector<1x1x128xf32>
      tpu.vector_store %arg3[%c0_13, %c1, %c0_14], %23 {strides = array<i32>} : memref<1x3x128xf32, #tpu.memory_space<vmem>>, vector<1x1x128xf32>,
      %cst_15 = arith.constant dense<0.000000e+00> : vector<128xf32>
      %24 = vector.multi_reduction <add>, %7, %cst_15 [0] : vector<320x128xf32> to vector<128xf32>
      %c0_16 = arith.constant 0 : index
      %c2 = arith.constant 2 : index
      %c0_17 = arith.constant 0 : index
      %25 = vector.load %arg3[%c0_16, %c2, %c0_17] : memref<1x3x128xf32, #tpu.memory_space<vmem>>, vector<1x1x128xf32>
      %26 = vector.shape_cast %25 : vector<1x1x128xf32> to vector<128xf32>
      %27 = vector.shape_cast %24 : vector<128xf32> to vector<1x1x128xf32>
      tpu.vector_store %arg3[%c0_16, %c2, %c0_17], %27 {strides = array<i32>} : memref<1x3x128xf32, #tpu.memory_space<vmem>>, vector<1x1x128xf32>,
    } else {
    }
    %c1_i32_0 = arith.constant 1 : i32
    %3 = arith.cmpi eq, %arg0, %c1_i32_0 : i32
    %4 = arith.extui %3 : i1 to i32
    %c0_i32_1 = arith.constant 0 : i32
    %5 = arith.cmpi ne, %4, %c0_i32_1 : i32
    scf.if %5 {
      %6 = tpu.iota {dimensions = array<i32: 0>} : vector<320x128xi32>
      %c305_i32 = arith.constant 305 : i32
      %7 = vector.broadcast %c305_i32 : i32 to vector<320x128xi32>
      %8 = arith.cmpi slt, %6, %7 : vector<320x128xi32>
      %c0 = arith.constant 0 : index
      %c0_2 = arith.constant 0 : index
      %9 = vector.load %arg1[%c0, %c0_2] : memref<320x128xf32, #tpu.memory_space<vmem>>, vector<320x128xf32>
      %cst = arith.constant 0.000000e+00 : f32
      %10 = vector.broadcast %cst : f32 to vector<320x128xf32>
      %11 = arith.select %8, %9, %10 : vector<320x128xi1>, vector<320x128xf32>
      %c0_3 = arith.constant 0 : index
      %c0_4 = arith.constant 0 : index
      %12 = vector.load %arg2[%c0_3, %c0_4] : memref<320x128xf32, #tpu.memory_space<vmem>>, vector<320x128xf32>
      %cst_5 = arith.constant 0.000000e+00 : f32
      %13 = vector.broadcast %cst_5 : f32 to vector<320x128xf32>
      %14 = arith.select %8, %12, %13 : vector<320x128xi1>, vector<320x128xf32>
      %cst_6 = arith.constant 1.000000e+00 : f32
      %15 = vector.broadcast %cst_6 : f32 to vector<320x128xf32>
      %16 = arith.subf %15, %11 : vector<320x128xf32>
      %cst_7 = arith.constant 0.000000e+00 : f32
      %17 = vector.broadcast %cst_7 : f32 to vector<320x128xf32>
      %18 = arith.maximumf %16, %17 : vector<320x128xf32>
      %cst_8 = arith.constant dense<0.000000e+00> : vector<128xf32>
      %19 = vector.multi_reduction <add>, %18, %cst_8 [0] : vector<320x128xf32> to vector<128xf32>
      %c0_9 = arith.constant 0 : index
      %c0_10 = arith.constant 0 : index
      %c0_11 = arith.constant 0 : index
      %20 = vector.load %arg3[%c0_9, %c0_10, %c0_11] : memref<1x3x128xf32, #tpu.memory_space<vmem>>, vector<1x1x128xf32>
      %21 = vector.shape_cast %20 : vector<1x1x128xf32> to vector<128xf32>
      %22 = vector.shape_cast %19 : vector<128xf32> to vector<1x1x128xf32>
      tpu.vector_store %arg3[%c0_9, %c0_10, %c0_11], %22 {strides = array<i32>} : memref<1x3x128xf32, #tpu.memory_space<vmem>>, vector<1x1x128xf32>,
      %cst_12 = arith.constant 1.000000e+00 : f32
      %23 = vector.broadcast %cst_12 : f32 to vector<320x128xf32>
      %24 = arith.addf %23, %14 : vector<320x128xf32>
      %cst_13 = arith.constant 0.000000e+00 : f32
      %25 = vector.broadcast %cst_13 : f32 to vector<320x128xf32>
      %26 = arith.maximumf %24, %25 : vector<320x128xf32>
      %cst_14 = arith.constant dense<0.000000e+00> : vector<128xf32>
      %27 = vector.multi_reduction <add>, %26, %cst_14 [0] : vector<320x128xf32> to vector<128xf32>
      %c0_15 = arith.constant 0 : index
      %c1 = arith.constant 1 : index
      %c0_16 = arith.constant 0 : index
      %28 = vector.load %arg3[%c0_15, %c1, %c0_16] : memref<1x3x128xf32, #tpu.memory_space<vmem>>, vector<1x1x128xf32>
      %29 = vector.shape_cast %28 : vector<1x1x128xf32> to vector<128xf32>
      %30 = vector.shape_cast %27 : vector<128xf32> to vector<1x1x128xf32>
      tpu.vector_store %arg3[%c0_15, %c1, %c0_16], %30 {strides = array<i32>} : memref<1x3x128xf32, #tpu.memory_space<vmem>>, vector<1x1x128xf32>,
      %cst_17 = arith.constant dense<0.000000e+00> : vector<128xf32>
      %31 = vector.multi_reduction <add>, %14, %cst_17 [0] : vector<320x128xf32> to vector<128xf32>
      %c0_18 = arith.constant 0 : index
      %c2 = arith.constant 2 : index
      %c0_19 = arith.constant 0 : index
      %32 = vector.load %arg3[%c0_18, %c2, %c0_19] : memref<1x3x128xf32, #tpu.memory_space<vmem>>, vector<1x1x128xf32>
      %33 = vector.shape_cast %32 : vector<1x1x128xf32> to vector<128xf32>
      %34 = vector.shape_cast %31 : vector<128xf32> to vector<1x1x128xf32>
      tpu.vector_store %arg3[%c0_18, %c2, %c0_19], %34 {strides = array<i32>} : memref<1x3x128xf32, #tpu.memory_space<vmem>>, vector<1x1x128xf32>,
    } else {
    }
    return
  }
  func.func @transform_0(%arg0: i32) -> (i32, i32) {
    %c0_i32 = arith.constant 0 : i32
    %c0_i32_0 = arith.constant 0 : i32
    return %arg0, %c0_i32 : i32, i32
  }
  func.func @transform_1(%arg0: i32) -> (i32, i32) {
    %c0_i32 = arith.constant 0 : i32
    %c0_i32_0 = arith.constant 0 : i32
    return %arg0, %c0_i32 : i32, i32
  }
  func.func @transform_2(%arg0: i32) -> (i32, i32, i32) {
    %c0_i32 = arith.constant 0 : i32
    %c0_i32_0 = arith.constant 0 : i32
    %c0_i32_1 = arith.constant 0 : i32
    return %arg0, %c0_i32, %c0_i32_0 : i32, i32, i32
  }
}

</mosaic_0001>

<llo_original>
// kernel: tpu_custom_call.1
$region0: #{tpu_custom_call.1}
  #allocation0 [shape = 'u32[]', space=smem, size = 0x4, offset = 0x4, fixed_abs, tag = 'smem constant byte address 0x4 - core index']
  #allocation1 [shape = 'u32[144,128]{1,0:T(1,128)}', space=vmem, size = 0x12000, scoped, tag = 'internal scratch']
  %s0 = inlined_call_operand.hbm [shape: f32[625,128], index: 0, kind: input, shape index: {}]
  %s1 = inlined_call_operand.hbm [shape: f32[625,128], index: 1, kind: input, shape index: {}]
  %s2 = inlined_call_operand.vmem [shape: f32[2,3,128], index: 2, kind: output, shape index: {}]
  %s3 = sld [smem:[#allocation0]]
  $region57: #{tpu_custom_call.1} parent=0
    _
  %s5 = ssub.s32 1, %s3
  %s6 = scalar_select 0, %s5, %s3
  $region1: #{tpu_custom_call.1} parent=0
    #allocation2 [shape = 'u8[327680]{0}', space=vmem, size = 0x50000, scoped, tag = 'input window, operand 0']
    #allocation3 [shape = 's32[2]{0}', space=sflag, size = 0x8, scoped, tag = 'scoped memory for tpu_custom_call.1']
    #allocation4 [shape = 'u8[327680]{0}', space=vmem, size = 0x50000, scoped, tag = 'input window, operand 1']
    #allocation5 [shape = 's32[2]{0}', space=sflag, size = 0x8, scoped, tag = 'scoped memory for tpu_custom_call.1']
    %7 = vsyncpa [#allocation3], 0
    %s8 = scalar_lea.sflag [#allocation3], 1
    %9 = vsyncpa %s8, 0
    %10 = vsyncpa [#allocation5], 0
    %s11 = scalar_lea.sflag [#allocation5], 1
    %12 = vsyncpa %s11, 0
    loop: start=0, step=1, limit=4
    $region2: #{tpu_custom_call.1} parent=1 // loop_pre_header
      _
    $region3: #{tpu_custom_call.1} parent=1 // loop_header
      %s14 = sphi 0, %s18
      %p15 = scmp.ge.s32.totalorder %s14, 4
      %s24 = sphi 0, %s26
      %s27 = sphi 0, %s24
      %s28 = sphi 0, %s27
      %s44 = sphi 0, %s28
      %s50 = sphi 0, %s52
      %s53 = sphi 0, %s50
      %s54 = sphi 0, %s53
      %s70 = sphi 0, %s54
      %s76 = sphi 0, %s78
      %s79 = sphi 0, %s76
      %s80 = sphi 0, %s79
      %s96 = sphi 0, %s80
    $region4: #{tpu_custom_call.1} parent=1 // loop_header_branch
      %17 = sbr.rel (%p15) target = $region8
    $region5: #{tpu_custom_call.1} parent=1 // loop_body
      %s19 = ssub.s32 %s14, 1
      %s20 = ssub.s32 %s14, 2
      %s21 = sadd.s32 %s14, 1
      %s22 = ssub.s32 %s14, %s21
      %p23 = scmp.eq.s32.totalorder %s22, 0
      %s25 = sadd.s32 %s24, 1
      %s26 = scalar_select %p23, %s24, %s25
      %p29 = pneg %p23
      %p30 = scmp.eq.s32.totalorder %s14, 1
      %p31 = por %p29, %p30
      %p32 = scmp.ne.s32.totalorder %s24, %s27
      %p33 = scmp.eq.s32.totalorder %s14, 0
      %p34 = por %p32, %p33
      %p35 = scmp.ne.s32.totalorder %s24, %s27
      %p36 = scmp.eq.s32.totalorder %s19, 1
      %p37 = por %p35, %p36
      %p38 = scmp.ne.s32.totalorder %s27, %s28
      %p39 = scmp.eq.s32.totalorder %s19, 0
      %p40 = por %p38, %p39
      %p41 = scmp.ne.s32.totalorder %s27, %s28
      %p42 = scmp.eq.s32.totalorder %s20, 1
      %p43 = por %p41, %p42
      %p45 = scmp.ne.s32.totalorder %s28, %s44
      %p46 = scmp.eq.s32.totalorder %s20, 0
      %p47 = por %p45, %p46
      %s48 = ssub.s32 %s14, %s21
      %p49 = scmp.eq.s32.totalorder %s48, 0
      %s51 = sadd.s32 %s50, 1
      %s52 = scalar_select %p49, %s50, %s51
      %p55 = pneg %p49
      %p56 = scmp.eq.s32.totalorder %s14, 1
      %p57 = por %p55, %p56
      %p58 = scmp.ne.s32.totalorder %s50, %s53
      %p59 = scmp.eq.s32.totalorder %s14, 0
      %p60 = por %p58, %p59
      %p61 = scmp.ne.s32.totalorder %s50, %s53
      %p62 = scmp.eq.s32.totalorder %s19, 1
      %p63 = por %p61, %p62
      %p64 = scmp.ne.s32.totalorder %s53, %s54
      %p65 = scmp.eq.s32.totalorder %s19, 0
      %p66 = por %p64, %p65
      %p67 = scmp.ne.s32.totalorder %s53, %s54
      %p68 = scmp.eq.s32.totalorder %s20, 1
      %p69 = por %p67, %p68
      %p71 = scmp.ne.s32.totalorder %s54, %s70
      %p72 = scmp.eq.s32.totalorder %s20, 0
      %p73 = por %p71, %p72
      %s74 = ssub.s32 %s14, %s21
      %p75 = scmp.eq.s32.totalorder %s74, 0
      %s77 = sadd.s32 %s76, 1
      %s78 = scalar_select %p75, %s76, %s77
      %p81 = pneg %p75
      %p82 = scmp.eq.s32.totalorder %s14, 1
      %p83 = por %p81, %p82
      %p84 = scmp.ne.s32.totalorder %s76, %s79
      %p85 = scmp.eq.s32.totalorder %s14, 0
      %p86 = por %p84, %p85
      %p87 = scmp.ne.s32.totalorder %s76, %s79
      %p88 = scmp.eq.s32.totalorder %s19, 1
      %p89 = por %p87, %p88
      %p90 = scmp.ne.s32.totalorder %s79, %s80
      %p91 = scmp.eq.s32.totalorder %s19, 0
      %p92 = por %p90, %p91
      %p93 = scmp.ne.s32.totalorder %s79, %s80
      %p94 = scmp.eq.s32.totalorder %s20, 1
      %p95 = por %p93, %p94
      %p97 = scmp.ne.s32.totalorder %s80, %s96
      %p98 = scmp.eq.s32.totalorder %s20, 0
      %p99 = por %p97, %p98
      %p100 = scmp.le.s32.totalorder 1, %s14
      %p101 = scmp.lt.s32.totalorder %s14, 3
      %p102 = pnand %p100, %p101
      %p103 = pneg %p102
      // Predicated region
      $region9: #{tpu_custom_call.1} parent=5 // pred_check
        _
      $region10: #{tpu_custom_call.1} parent=5 // pred_check_branch
        %105 = sbr.rel (%p102) target = $region12
      $region11: #{tpu_custom_call.1} parent=5 // pred_region
        %s106 = ssub.s32 %s14, 1
      $region12: #{tpu_custom_call.1} parent=5 // pred_fallthru
        _
      %p107 = scmp.lt.s32.totalorder %s14, 2
      // Predicated region
      $region13: #{tpu_custom_call.1} parent=5 // pred_check
        %p108 = pneg %p107
      $region14: #{tpu_custom_call.1} parent=5 // pred_check_branch
        %110 = sbr.rel (%p108) target = $region16
      $region15: #{tpu_custom_call.1} parent=5 // pred_region
        // Predicated region
        $region17: #{tpu_custom_call.1} parent=15 // pred_check
          %p111 = pneg %p34
        $region18: #{tpu_custom_call.1} parent=15 // pred_check_branch
          %113 = sbr.rel (%p111) target = $region20
        $region19: #{tpu_custom_call.1} parent=15 // pred_region
          %s114 = sand.u32 %s24, 1
          %s115 = scalar_lea.sflag [#allocation3], %s114
          %s116 = sand.u32 %s24, 1
          %s117 = smul.addr %s116, 320
          %s118 = scalar_lea.vmem [#allocation2], %s117
          %s119 = smul.u32 40, %s14
          %s120 = ssub.s32 79, %s119
          %p121 = scmp.lt.s32.totalorder %s120, 40
          %s122 = scalar_select %p121, %s120, 40
          %s123 = smul.u32 128, %s122
          %s125 = ssub.s32 5120, %s123
          %126 = vsyncadd %s115, %s125
          %p127 = scmp.ne.s32.totalorder 0, %s123
          %s128 = smul.addr %s119, 128
          %s129 = scalar_lea.hbm %s0, %s128
          %s130 = smul.u32 8, %s122
          %s131 = sshll.u32 %s118, 4
          %s132 = int_to_ptr.vmem [resolvable:$true] %s131
          %s133 = sshll.u32 %s130, 4
          %137 = dma.hbm_to_vmem [thread:$0]  (%p127), %s129, %s133, %s132, %s115, 128, 128, 8
        $region20: #{tpu_custom_call.1} parent=15 // pred_fallthru
          _
        // Predicated region
        $region21: #{tpu_custom_call.1} parent=15 // pred_check
          %p138 = pneg %p60
        $region22: #{tpu_custom_call.1} parent=15 // pred_check_branch
          %140 = sbr.rel (%p138) target = $region24
        $region23: #{tpu_custom_call.1} parent=15 // pred_region
          %s141 = sand.u32 %s50, 1
          %s142 = scalar_lea.sflag [#allocation5], %s141
          %s143 = sand.u32 %s50, 1
          %s144 = smul.addr %s143, 320
          %s145 = scalar_lea.vmem [#allocation4], %s144
          %s146 = smul.u32 40, %s14
          %s147 = ssub.s32 79, %s146
          %p148 = scmp.lt.s32.totalorder %s147, 40
          %s149 = scalar_select %p148, %s147, 40
          %s150 = smul.u32 128, %s149
          %s152 = ssub.s32 5120, %s150
          %153 = vsyncadd %s142, %s152
          %p154 = scmp.ne.s32.totalorder 0, %s150
          %s155 = smul.addr %s146, 128
          %s156 = scalar_lea.hbm %s1, %s155
          %s157 = smul.u32 8, %s149
          %s158 = sshll.u32 %s145, 4
          %s159 = int_to_ptr.vmem [resolvable:$true] %s158
          %s160 = sshll.u32 %s157, 4
          %164 = dma.hbm_to_vmem [thread:$0]  (%p154), %s156, %s160, %s159, %s142, 128, 128, 8
        $region24: #{tpu_custom_call.1} parent=15 // pred_fallthru
          _
      $region16: #{tpu_custom_call.1} parent=5 // pred_fallthru
        _
      %p165 = scmp.le.s32.totalorder 1, %s14
      %p166 = scmp.lt.s32.totalorder %s14, 3
      %p167 = pnand %p165, %p166
      %p168 = pneg %p167
      // Predicated region
      $region25: #{tpu_custom_call.1} parent=5 // pred_check
        _
      $region26: #{tpu_custom_call.1} parent=5 // pred_check_branch
        %170 = sbr.rel (%p167) target = $region28
      $region27: #{tpu_custom_call.1} parent=5 // pred_region
        %s171 = ssub.s32 %s14, 1
        %s172 = sand.u32 %s27, 1
        %s173 = scalar_lea.sflag [#allocation3], %s172
        %s174 = sand.u32 %s27, 1
        %s175 = smul.addr %s174, 320
        %s176 = scalar_lea.vmem [#allocation2], %s175
        // Predicated region
        $region29: #{tpu_custom_call.1} parent=27 // pred_check
          %p177 = pneg %p40
        $region30: #{tpu_custom_call.1} parent=27 // pred_check_branch
          %179 = sbr.rel (%p177) target = $region32
        $region31: #{tpu_custom_call.1} parent=27 // pred_region
          %180 = dma.done %s173, 5120
        $region32: #{tpu_custom_call.1} parent=27 // pred_fallthru
          _
        %s181 = sand.u32 %s53, 1
        %s182 = scalar_lea.sflag [#allocation5], %s181
        %s183 = sand.u32 %s53, 1
        %s184 = smul.addr %s183, 320
        %s185 = scalar_lea.vmem [#allocation4], %s184
        // Predicated region
        $region33: #{tpu_custom_call.1} parent=27 // pred_check
          %p186 = pneg %p66
        $region34: #{tpu_custom_call.1} parent=27 // pred_check_branch
          %188 = sbr.rel (%p186) target = $region36
        $region35: #{tpu_custom_call.1} parent=27 // pred_region
          %189 = dma.done %s182, 5120
        $region36: #{tpu_custom_call.1} parent=27 // pred_fallthru
          _
        %s190 = sand.u32 %s27, 1
        %s191 = scalar_lea.sflag [#allocation3], %s190
        %s192 = sand.u32 %s27, 1
        %s193 = smul.addr %s192, 320
        %s194 = scalar_lea.vmem [#allocation2], %s193
        %p195 = pneg %p40
        %p196 = pneg %p37
        %s197 = sand.u32 %s53, 1
        %s198 = scalar_lea.sflag [#allocation5], %s197
        %s199 = sand.u32 %s53, 1
        %s200 = smul.addr %s199, 320
        %s201 = scalar_lea.vmem [#allocation4], %s200
        %p202 = pneg %p66
        %p203 = pneg %p63
        %p204 = pneg %p92
        %p205 = pneg %p89
        %p206 = scmp.lt.s32.totalorder %s19, 1
        %s207 = scalar_select %p206, %s19, 1
        %s208 = smul.addr %s207, 4
        %s209 = scalar_lea.vmem %s2, %s208
        %s210 = smul.u32 40, %s19
        %s211 = ssub.s32 79, %s210
        %p212 = scmp.lt.s32.totalorder %s211, 40
        %s213 = scalar_select %p212, %s211, 40
        %s214 = smul.u32 128, %s213
        %s215 = smul.u32 40, %s19
        %s216 = ssub.s32 79, %s215
        %p217 = scmp.lt.s32.totalorder %s216, 40
        %s218 = scalar_select %p217, %s216, 40
        %s219 = smul.u32 128, %s218
        %p220 = scmp.lt.s32.totalorder %s19, 1
        %s221 = scalar_select %p220, %s19, 1
        %s222 = smul.addr %s221, 4
        %s223 = scalar_lea.vmem %s2, %s222
        %p224 = scmp.ne.s32.totalorder %s19, 1
        // Predicated region
        $region37: #{tpu_custom_call.1} parent=27 // pred_check
          %p225 = pneg %p224
        $region38: #{tpu_custom_call.1} parent=27 // pred_check_branch
          %227 = sbr.rel (%p225) target = $region40
        $region39: #{tpu_custom_call.1} parent=27 // pred_region
          %v228 = vld [vmem:[%s176] sm:$0xff]
          %v229 = vld [vmem:[%s176 + $0x8] sm:$0xff]
          %v230 = vld [vmem:[%s176 + $0x10] sm:$0xff]
          %v231 = vld [vmem:[%s176 + $0x18] sm:$0xff]
          %v232 = vld [vmem:[%s176 + $0x20] sm:$0xff]
          %v233 = vld [vmem:[%s176 + $0x28] sm:$0xff]
          %v234 = vld [vmem:[%s176 + $0x30] sm:$0xff]
          %v235 = vld [vmem:[%s176 + $0x38] sm:$0xff]
          %v236 = vld [vmem:[%s176 + $0x40] sm:$0xff]
          %v237 = vld [vmem:[%s176 + $0x48] sm:$0xff]
          %v238 = vld [vmem:[%s176 + $0x50] sm:$0xff]
          %v239 = vld [vmem:[%s176 + $0x58] sm:$0xff]
          %v240 = vld [vmem:[%s176 + $0x60] sm:$0xff]
          %v241 = vld [vmem:[%s176 + $0x68] sm:$0xff]
          %v242 = vld [vmem:[%s176 + $0x70] sm:$0xff]
          %v243 = vld [vmem:[%s176 + $0x78] sm:$0xff]
          %v244 = vld [vmem:[%s176 + $0x80] sm:$0xff]
          %v245 = vld [vmem:[%s176 + $0x88] sm:$0xff]
          %v246 = vld [vmem:[%s176 + $0x90] sm:$0xff]
          %v247 = vld [vmem:[%s176 + $0x98] sm:$0xff]
          %v248 = vld [vmem:[%s176 + $0xa0] sm:$0xff]
          %v249 = vld [vmem:[%s176 + $0xa8] sm:$0xff]
          %v250 = vld [vmem:[%s176 + $0xb0] sm:$0xff]
          %v251 = vld [vmem:[%s176 + $0xb8] sm:$0xff]
          %v252 = vld [vmem:[%s176 + $0xc0] sm:$0xff]
          %v253 = vld [vmem:[%s176 + $0xc8] sm:$0xff]
          %v254 = vld [vmem:[%s176 + $0xd0] sm:$0xff]
          %v255 = vld [vmem:[%s176 + $0xd8] sm:$0xff]
          %v256 = vld [vmem:[%s176 + $0xe0] sm:$0xff]
          %v257 = vld [vmem:[%s176 + $0xe8] sm:$0xff]
          %v258 = vld [vmem:[%s176 + $0xf0] sm:$0xff]
          %v259 = vld [vmem:[%s176 + $0xf8] sm:$0xff]
          %v260 = vld [vmem:[%s176 + $0x100] sm:$0xff]
          %v261 = vld [vmem:[%s176 + $0x108] sm:$0xff]
          %v262 = vld [vmem:[%s176 + $0x110] sm:$0xff]
          %v263 = vld [vmem:[%s176 + $0x118] sm:$0xff]
          %v264 = vld [vmem:[%s176 + $0x120] sm:$0xff]
          %v265 = vld [vmem:[%s176 + $0x128] sm:$0xff]
          %v266 = vld [vmem:[%s176 + $0x130] sm:$0xff]
          %v267 = vld [vmem:[%s176 + $0x138] sm:$0xff]
          %v268 = vld [vmem:[%s185] sm:$0xff]
          %v269 = vld [vmem:[%s185 + $0x8] sm:$0xff]
          %v270 = vld [vmem:[%s185 + $0x10] sm:$0xff]
          %v271 = vld [vmem:[%s185 + $0x18] sm:$0xff]
          %v272 = vld [vmem:[%s185 + $0x20] sm:$0xff]
          %v273 = vld [vmem:[%s185 + $0x28] sm:$0xff]
          %v274 = vld [vmem:[%s185 + $0x30] sm:$0xff]
          %v275 = vld [vmem:[%s185 + $0x38] sm:$0xff]
          %v276 = vld [vmem:[%s185 + $0x40] sm:$0xff]
          %v277 = vld [vmem:[%s185 + $0x48] sm:$0xff]
          %v278 = vld [vmem:[%s185 + $0x50] sm:$0xff]
          %v279 = vld [vmem:[%s185 + $0x58] sm:$0xff]
          %v280 = vld [vmem:[%s185 + $0x60] sm:$0xff]
          %v281 = vld [vmem:[%s185 + $0x68] sm:$0xff]
          %v282 = vld [vmem:[%s185 + $0x70] sm:$0xff]
          %v283 = vld [vmem:[%s185 + $0x78] sm:$0xff]
          %v284 = vld [vmem:[%s185 + $0x80] sm:$0xff]
          %v285 = vld [vmem:[%s185 + $0x88] sm:$0xff]
          %v286 = vld [vmem:[%s185 + $0x90] sm:$0xff]
          %v287 = vld [vmem:[%s185 + $0x98] sm:$0xff]
          %v288 = vld [vmem:[%s185 + $0xa0] sm:$0xff]
          %v289 = vld [vmem:[%s185 + $0xa8] sm:$0xff]
          %v290 = vld [vmem:[%s185 + $0xb0] sm:$0xff]
          %v291 = vld [vmem:[%s185 + $0xb8] sm:$0xff]
          %v292 = vld [vmem:[%s185 + $0xc0] sm:$0xff]
          %v293 = vld [vmem:[%s185 + $0xc8] sm:$0xff]
          %v294 = vld [vmem:[%s185 + $0xd0] sm:$0xff]
          %v295 = vld [vmem:[%s185 + $0xd8] sm:$0xff]
          %v296 = vld [vmem:[%s185 + $0xe0] sm:$0xff]
          %v297 = vld [vmem:[%s185 + $0xe8] sm:$0xff]
          %v298 = vld [vmem:[%s185 + $0xf0] sm:$0xff]
          %v299 = vld [vmem:[%s185 + $0xf8] sm:$0xff]
          %v300 = vld [vmem:[%s185 + $0x100] sm:$0xff]
          %v301 = vld [vmem:[%s185 + $0x108] sm:$0xff]
          %v302 = vld [vmem:[%s185 + $0x110] sm:$0xff]
          %v303 = vld [vmem:[%s185 + $0x118] sm:$0xff]
          %v304 = vld [vmem:[%s185 + $0x120] sm:$0xff]
          %v305 = vld [vmem:[%s185 + $0x128] sm:$0xff]
          %v306 = vld [vmem:[%s185 + $0x130] sm:$0xff]
          %v307 = vld [vmem:[%s185 + $0x138] sm:$0xff]
          %v308 = vsub.f32 1.0, %v228
          %v309 = vsub.f32 1.0, %v229
          %v310 = vsub.f32 1.0, %v230
          %v311 = vsub.f32 1.0, %v231
          %v312 = vsub.f32 1.0, %v232
          %v313 = vsub.f32 1.0, %v233
          %v314 = vsub.f32 1.0, %v234
          %v315 = vsub.f32 1.0, %v235
          %v316 = vsub.f32 1.0, %v236
          %v317 = vsub.f32 1.0, %v237
          %v318 = vsub.f32 1.0, %v238
          %v319 = vsub.f32 1.0, %v239
          %v320 = vsub.f32 1.0, %v240
          %v321 = vsub.f32 1.0, %v241
          %v322 = vsub.f32 1.0, %v242
          %v323 = vsub.f32 1.0, %v243
          %v324 = vsub.f32 1.0, %v244
          %v325 = vsub.f32 1.0, %v245
          %v326 = vsub.f32 1.0, %v246
          %v327 = vsub.f32 1.0, %v247
          %v328 = vsub.f32 1.0, %v248
          %v329 = vsub.f32 1.0, %v249
          %v330 = vsub.f32 1.0, %v250
          %v331 = vsub.f32 1.0, %v251
          %v332 = vsub.f32 1.0, %v252
          %v333 = vsub.f32 1.0, %v253
          %v334 = vsub.f32 1.0, %v254
          %v335 = vsub.f32 1.0, %v255
          %v336 = vsub.f32 1.0, %v256
          %v337 = vsub.f32 1.0, %v257
          %v338 = vsub.f32 1.0, %v258
          %v339 = vsub.f32 1.0, %v259
          %v340 = vsub.f32 1.0, %v260
          %v341 = vsub.f32 1.0, %v261
          %v342 = vsub.f32 1.0, %v262
          %v343 = vsub.f32 1.0, %v263
          %v344 = vsub.f32 1.0, %v264
          %v345 = vsub.f32 1.0, %v265
          %v346 = vsub.f32 1.0, %v266
          %v347 = vsub.f32 1.0, %v267
          %v348 = vmax.f32 %v308, 0.0
          %v349 = vmax.f32 %v309, 0.0
          %v350 = vmax.f32 %v310, 0.0
          %v351 = vmax.f32 %v311, 0.0
          %v352 = vmax.f32 %v312, 0.0
          %v353 = vmax.f32 %v313, 0.0
          %v354 = vmax.f32 %v314, 0.0
          %v355 = vmax.f32 %v315, 0.0
          %v356 = vmax.f32 %v316, 0.0
          %v357 = vmax.f32 %v317, 0.0
          %v358 = vmax.f32 %v318, 0.0
          %v359 = vmax.f32 %v319, 0.0
          %v360 = vmax.f32 %v320, 0.0
          %v361 = vmax.f32 %v321, 0.0
          %v362 = vmax.f32 %v322, 0.0
          %v363 = vmax.f32 %v323, 0.0
          %v364 = vmax.f32 %v324, 0.0
          %v365 = vmax.f32 %v325, 0.0
          %v366 = vmax.f32 %v326, 0.0
          %v367 = vmax.f32 %v327, 0.0
          %v368 = vmax.f32 %v328, 0.0
          %v369 = vmax.f32 %v329, 0.0
          %v370 = vmax.f32 %v330, 0.0
          %v371 = vmax.f32 %v331, 0.0
          %v372 = vmax.f32 %v332, 0.0
          %v373 = vmax.f32 %v333, 0.0
          %v374 = vmax.f32 %v334, 0.0
          %v375 = vmax.f32 %v335, 0.0
          %v376 = vmax.f32 %v336, 0.0
          %v377 = vmax.f32 %v337, 0.0
          %v378 = vmax.f32 %v338, 0.0
          %v379 = vmax.f32 %v339, 0.0
          %v380 = vmax.f32 %v340, 0.0
          %v381 = vmax.f32 %v341, 0.0
          %v382 = vmax.f32 %v342, 0.0
          %v383 = vmax.f32 %v343, 0.0
          %v384 = vmax.f32 %v344, 0.0
          %v385 = vmax.f32 %v345, 0.0
          %v386 = vmax.f32 %v346, 0.0
          %v387 = vmax.f32 %v347, 0.0
          %v388 = vadd.f32 %v348, %v349
          %v389 = vadd.f32 %v388, %v350
          %v390 = vadd.f32 %v389, %v351
          %v391 = vadd.f32 %v390, %v352
          %v392 = vadd.f32 %v391, %v353
          %v393 = vadd.f32 %v392, %v354
          %v394 = vadd.f32 %v393, %v355
          %v395 = vadd.f32 %v394, %v356
          %v396 = vadd.f32 %v395, %v357
          %v397 = vadd.f32 %v396, %v358
          %v398 = vadd.f32 %v397, %v359
          %v399 = vadd.f32 %v398, %v360
          %v400 = vadd.f32 %v399, %v361
          %v401 = vadd.f32 %v400, %v362
          %v402 = vadd.f32 %v401, %v363
          %v403 = vadd.f32 %v402, %v364
          %v404 = vadd.f32 %v403, %v365
          %v405 = vadd.f32 %v404, %v366
          %v406 = vadd.f32 %v405, %v367
          %v407 = vadd.f32 %v406, %v368
          %v408 = vadd.f32 %v407, %v369
          %v409 = vadd.f32 %v408, %v370
          %v410 = vadd.f32 %v409, %v371
          %v411 = vadd.f32 %v410, %v372
          %v412 = vadd.f32 %v411, %v373
          %v413 = vadd.f32 %v412, %v374
          %v414 = vadd.f32 %v413, %v375
          %v415 = vadd.f32 %v414, %v376
          %v416 = vadd.f32 %v415, %v377
          %v417 = vadd.f32 %v416, %v378
          %v418 = vadd.f32 %v417, %v379
          %v419 = vadd.f32 %v418, %v380
          %v420 = vadd.f32 %v419, %v381
          %v421 = vadd.f32 %v420, %v382
          %v422 = vadd.f32 %v421, %v383
          %v423 = vadd.f32 %v422, %v384
          %v424 = vadd.f32 %v423, %v385
          %v425 = vadd.f32 %v424, %v386
          %v426 = vadd.f32 %v425, %v387
          %v427 = vrot.slane %v426, 4
          %v428 = vadd.f32 %v426, %v427
          %v429 = vrot.slane %v428, 2
          %v430 = vadd.f32 %v428, %v429
          %v431 = vrot.slane %v430, 1
          %v432 = vadd.f32 %v430, %v431
          %433 = vst [vmem:[%s223] sm:$0x1] %v432
          %v434 = vadd.f32 %v268, 1.0
          %v435 = vadd.f32 %v269, 1.0
          %v436 = vadd.f32 %v270, 1.0
          %v437 = vadd.f32 %v271, 1.0
          %v438 = vadd.f32 %v272, 1.0
          %v439 = vadd.f32 %v273, 1.0
          %v440 = vadd.f32 %v274, 1.0
          %v441 = vadd.f32 %v275, 1.0
          %v442 = vadd.f32 %v276, 1.0
          %v443 = vadd.f32 %v277, 1.0
          %v444 = vadd.f32 %v278, 1.0
          %v445 = vadd.f32 %v279, 1.0
          %v446 = vadd.f32 %v280, 1.0
          %v447 = vadd.f32 %v281, 1.0
          %v448 = vadd.f32 %v282, 1.0
          %v449 = vadd.f32 %v283, 1.0
          %v450 = vadd.f32 %v284, 1.0
          %v451 = vadd.f32 %v285, 1.0
          %v452 = vadd.f32 %v286, 1.0
          %v453 = vadd.f32 %v287, 1.0
          %v454 = vadd.f32 %v288, 1.0
          %v455 = vadd.f32 %v289, 1.0
          %v456 = vadd.f32 %v290, 1.0
          %v457 = vadd.f32 %v291, 1.0
          %v458 = vadd.f32 %v292, 1.0
          %v459 = vadd.f32 %v293, 1.0
          %v460 = vadd.f32 %v294, 1.0
          %v461 = vadd.f32 %v295, 1.0
          %v462 = vadd.f32 %v296, 1.0
          %v463 = vadd.f32 %v297, 1.0
          %v464 = vadd.f32 %v298, 1.0
          %v465 = vadd.f32 %v299, 1.0
          %v466 = vadd.f32 %v300, 1.0
          %v467 = vadd.f32 %v301, 1.0
          %v468 = vadd.f32 %v302, 1.0
          %v469 = vadd.f32 %v303, 1.0
          %v470 = vadd.f32 %v304, 1.0
          %v471 = vadd.f32 %v305, 1.0
          %v472 = vadd.f32 %v306, 1.0
          %v473 = vadd.f32 %v307, 1.0
          %v474 = vmax.f32 %v434, 0.0
          %v475 = vmax.f32 %v435, 0.0
          %v476 = vmax.f32 %v436, 0.0
          %v477 = vmax.f32 %v437, 0.0
          %v478 = vmax.f32 %v438, 0.0
          %v479 = vmax.f32 %v439, 0.0
          %v480 = vmax.f32 %v440, 0.0
          %v481 = vmax.f32 %v441, 0.0
          %v482 = vmax.f32 %v442, 0.0
          %v483 = vmax.f32 %v443, 0.0
          %v484 = vmax.f32 %v444, 0.0
          %v485 = vmax.f32 %v445, 0.0
          %v486 = vmax.f32 %v446, 0.0
          %v487 = vmax.f32 %v447, 0.0
          %v488 = vmax.f32 %v448, 0.0
          %v489 = vmax.f32 %v449, 0.0
          %v490 = vmax.f32 %v450, 0.0
          %v491 = vmax.f32 %v451, 0.0
          %v492 = vmax.f32 %v452, 0.0
          %v493 = vmax.f32 %v453, 0.0
          %v494 = vmax.f32 %v454, 0.0
          %v495 = vmax.f32 %v455, 0.0
          %v496 = vmax.f32 %v456, 0.0
          %v497 = vmax.f32 %v457, 0.0
          %v498 = vmax.f32 %v458, 0.0
          %v499 = vmax.f32 %v459, 0.0
          %v500 = vmax.f32 %v460, 0.0
          %v501 = vmax.f32 %v461, 0.0
          %v502 = vmax.f32 %v462, 0.0
          %v503 = vmax.f32 %v463, 0.0
          %v504 = vmax.f32 %v464, 0.0
          %v505 = vmax.f32 %v465, 0.0
          %v506 = vmax.f32 %v466, 0.0
          %v507 = vmax.f32 %v467, 0.0
          %v508 = vmax.f32 %v468, 0.0
          %v509 = vmax.f32 %v469, 0.0
          %v510 = vmax.f32 %v470, 0.0
          %v511 = vmax.f32 %v471, 0.0
          %v512 = vmax.f32 %v472, 0.0
          %v513 = vmax.f32 %v473, 0.0
          %v514 = vadd.f32 %v474, %v475
          %v515 = vadd.f32 %v514, %v476
          %v516 = vadd.f32 %v515, %v477
          %v517 = vadd.f32 %v516, %v478
          %v518 = vadd.f32 %v517, %v479
          %v519 = vadd.f32 %v518, %v480
          %v520 = vadd.f32 %v519, %v481
          %v521 = vadd.f32 %v520, %v482
          %v522 = vadd.f32 %v521, %v483
          %v523 = vadd.f32 %v522, %v484
          %v524 = vadd.f32 %v523, %v485
          %v525 = vadd.f32 %v524, %v486
          %v526 = vadd.f32 %v525, %v487
          %v527 = vadd.f32 %v526, %v488
          %v528 = vadd.f32 %v527, %v489
          %v529 = vadd.f32 %v528, %v490
          %v530 = vadd.f32 %v529, %v491
          %v531 = vadd.f32 %v530, %v492
          %v532 = vadd.f32 %v531, %v493
          %v533 = vadd.f32 %v532, %v494
          %v534 = vadd.f32 %v533, %v495
          %v535 = vadd.f32 %v534, %v496
          %v536 = vadd.f32 %v535, %v497
          %v537 = vadd.f32 %v536, %v498
          %v538 = vadd.f32 %v537, %v499
          %v539 = vadd.f32 %v538, %v500
          %v540 = vadd.f32 %v539, %v501
          %v541 = vadd.f32 %v540, %v502
          %v542 = vadd.f32 %v541, %v503
          %v543 = vadd.f32 %v542, %v504
          %v544 = vadd.f32 %v543, %v505
          %v545 = vadd.f32 %v544, %v506
          %v546 = vadd.f32 %v545, %v507
          %v547 = vadd.f32 %v546, %v508
          %v548 = vadd.f32 %v547, %v509
          %v549 = vadd.f32 %v548, %v510
          %v550 = vadd.f32 %v549, %v511
          %v551 = vadd.f32 %v550, %v512
          %v552 = vadd.f32 %v551, %v513
          %v553 = vrot.slane %v552, 4
          %v554 = vadd.f32 %v552, %v553
          %v555 = vrot.slane %v554, 2
          %v556 = vadd.f32 %v554, %v555
          %v557 = vrot.slane %v556, 1
          %v558 = vadd.f32 %v556, %v557
          %559 = vst [vmem:[%s223 + $0x1] sm:$0x1] %v558
          %v560 = vadd.f32 %v268, %v269
          %v561 = vadd.f32 %v560, %v270
          %v562 = vadd.f32 %v561, %v271
          %v563 = vadd.f32 %v562, %v272
          %v564 = vadd.f32 %v563, %v273
          %v565 = vadd.f32 %v564, %v274
          %v566 = vadd.f32 %v565, %v275
          %v567 = vadd.f32 %v566, %v276
          %v568 = vadd.f32 %v567, %v277
          %v569 = vadd.f32 %v568, %v278
          %v570 = vadd.f32 %v569, %v279
          %v571 = vadd.f32 %v570, %v280
          %v572 = vadd.f32 %v571, %v281
          %v573 = vadd.f32 %v572, %v282
          %v574 = vadd.f32 %v573, %v283
          %v575 = vadd.f32 %v574, %v284
          %v576 = vadd.f32 %v575, %v285
          %v577 = vadd.f32 %v576, %v286
          %v578 = vadd.f32 %v577, %v287
          %v579 = vadd.f32 %v578, %v288
          %v580 = vadd.f32 %v579, %v289
          %v581 = vadd.f32 %v580, %v290
          %v582 = vadd.f32 %v581, %v291
          %v583 = vadd.f32 %v582, %v292
          %v584 = vadd.f32 %v583, %v293
          %v585 = vadd.f32 %v584, %v294
          %v586 = vadd.f32 %v585, %v295
          %v587 = vadd.f32 %v586, %v296
          %v588 = vadd.f32 %v587, %v297
          %v589 = vadd.f32 %v588, %v298
          %v590 = vadd.f32 %v589, %v299
          %v591 = vadd.f32 %v590, %v300
          %v592 = vadd.f32 %v591, %v301
          %v593 = vadd.f32 %v592, %v302
          %v594 = vadd.f32 %v593, %v303
          %v595 = vadd.f32 %v594, %v304
          %v596 = vadd.f32 %v595, %v305
          %v597 = vadd.f32 %v596, %v306
          %v598 = vadd.f32 %v597, %v307
          %v599 = vrot.slane %v598, 4
          %v600 = vadd.f32 %v598, %v599
          %v601 = vrot.slane %v600, 2
          %v602 = vadd.f32 %v600, %v601
          %v603 = vrot.slane %v602, 1
          %v604 = vadd.f32 %v602, %v603
          %605 = vst [vmem:[%s223 + $0x2] sm:$0x1] %v604
        $region40: #{tpu_custom_call.1} parent=27 // pred_fallthru
          _
        %p606 = scmp.eq.s32.totalorder %s19, 1
        // Predicated region
        $region41: #{tpu_custom_call.1} parent=27 // pred_check
          %p607 = pneg %p606
        $region42: #{tpu_custom_call.1} parent=27 // pred_check_branch
          %609 = sbr.rel (%p607) target = $region44
        $region43: #{tpu_custom_call.1} parent=27 // pred_region
          %v610 = vlaneseq
          %v611 = vshrl.u32 %v610, 7
          %v612 = vadd.s32 %v611, 8
          %v613 = vadd.s32 %v611, 16
          %v614 = vadd.s32 %v611, 24
          %v615 = vadd.s32 %v611, 32
          %v616 = vadd.s32 %v611, 40
          %v617 = vadd.s32 %v611, 48
          %v618 = vadd.s32 %v611, 56
          %v619 = vadd.s32 %v611, 64
          %v620 = vadd.s32 %v611, 72
          %v621 = vadd.s32 %v611, 80
          %v622 = vadd.s32 %v611, 88
          %v623 = vadd.s32 %v611, 96
          %v624 = vadd.s32 %v611, 104
          %v625 = vadd.s32 %v611, 112
          %v626 = vadd.s32 %v611, 120
          %v627 = vadd.s32 %v611, 128
          %v628 = vadd.s32 %v611, 136
          %v629 = vadd.s32 %v611, 144
          %v630 = vadd.s32 %v611, 152
          %v631 = vadd.s32 %v611, 160
          %v632 = vadd.s32 %v611, 168
          %v633 = vadd.s32 %v611, 176
          %v634 = vadd.s32 %v611, 184
          %v635 = vadd.s32 %v611, 192
          %v636 = vadd.s32 %v611, 200
          %v637 = vadd.s32 %v611, 208
          %v638 = vadd.s32 %v611, 216
          %v639 = vadd.s32 %v611, 224
          %v640 = vadd.s32 %v611, 232
          %v641 = vadd.s32 %v611, 240
          %v642 = vadd.s32 %v611, 248
          %v643 = vadd.s32 %v611, 256
          %v644 = vadd.s32 %v611, 264
          %v645 = vadd.s32 %v611, 272
          %v646 = vadd.s32 %v611, 280
          %v647 = vadd.s32 %v611, 288
          %v648 = vadd.s32 %v611, 296
          %v649 = vadd.s32 %v611, 304
          %v650 = vadd.s32 %v611, 312
          %vm651 = vcmp.lt.s32.totalorder %v611, 305
          %vm652 = vcmp.lt.s32.totalorder %v612, 305
          %vm653 = vcmp.lt.s32.totalorder %v613, 305
          %vm654 = vcmp.lt.s32.totalorder %v614, 305
          %vm655 = vcmp.lt.s32.totalorder %v615, 305
          %vm656 = vcmp.lt.s32.totalorder %v616, 305
          %vm657 = vcmp.lt.s32.totalorder %v617, 305
          %vm658 = vcmp.lt.s32.totalorder %v618, 305
          %vm659 = vcmp.lt.s32.totalorder %v619, 305
          %vm660 = vcmp.lt.s32.totalorder %v620, 305
          %vm661 = vcmp.lt.s32.totalorder %v621, 305
          %vm662 = vcmp.lt.s32.totalorder %v622, 305
          %vm663 = vcmp.lt.s32.totalorder %v623, 305
          %vm664 = vcmp.lt.s32.totalorder %v624, 305
          %vm665 = vcmp.lt.s32.totalorder %v625, 305
          %vm666 = vcmp.lt.s32.totalorder %v626, 305
          %vm667 = vcmp.lt.s32.totalorder %v627, 305
          %vm668 = vcmp.lt.s32.totalorder %v628, 305
          %vm669 = vcmp.lt.s32.totalorder %v629, 305
          %vm670 = vcmp.lt.s32.totalorder %v630, 305
          %vm671 = vcmp.lt.s32.totalorder %v631, 305
          %vm672 = vcmp.lt.s32.totalorder %v632, 305
          %vm673 = vcmp.lt.s32.totalorder %v633, 305
          %vm674 = vcmp.lt.s32.totalorder %v634, 305
          %vm675 = vcmp.lt.s32.totalorder %v635, 305
          %vm676 = vcmp.lt.s32.totalorder %v636, 305
          %vm677 = vcmp.lt.s32.totalorder %v637, 305
          %vm678 = vcmp.lt.s32.totalorder %v638, 305
          %vm679 = vcmp.lt.s32.totalorder %v639, 305
          %vm680 = vcmp.lt.s32.totalorder %v640, 305
          %vm681 = vcmp.lt.s32.totalorder %v641, 305
          %vm682 = vcmp.lt.s32.totalorder %v642, 305
          %vm683 = vcmp.lt.s32.totalorder %v643, 305
          %vm684 = vcmp.lt.s32.totalorder %v644, 305
          %vm685 = vcmp.lt.s32.totalorder %v645, 305
          %vm686 = vcmp.lt.s32.totalorder %v646, 305
          %vm687 = vcmp.lt.s32.totalorder %v647, 305
          %vm688 = vcmp.lt.s32.totalorder %v648, 305
          %vm689 = vcmp.lt.s32.totalorder %v649, 305
          %vm690 = vcmp.lt.s32.totalorder %v650, 305
          %v691 = vld [vmem:[%s176] sm:$0xff]
          %v692 = vld [vmem:[%s176 + $0x8] sm:$0xff]
          %v693 = vld [vmem:[%s176 + $0x10] sm:$0xff]
          %v694 = vld [vmem:[%s176 + $0x18] sm:$0xff]
          %v695 = vld [vmem:[%s176 + $0x20] sm:$0xff]
          %v696 = vld [vmem:[%s176 + $0x28] sm:$0xff]
          %v697 = vld [vmem:[%s176 + $0x30] sm:$0xff]
          %v698 = vld [vmem:[%s176 + $0x38] sm:$0xff]
          %v699 = vld [vmem:[%s176 + $0x40] sm:$0xff]
          %v700 = vld [vmem:[%s176 + $0x48] sm:$0xff]
          %v701 = vld [vmem:[%s176 + $0x50] sm:$0xff]
          %v702 = vld [vmem:[%s176 + $0x58] sm:$0xff]
          %v703 = vld [vmem:[%s176 + $0x60] sm:$0xff]
          %v704 = vld [vmem:[%s176 + $0x68] sm:$0xff]
          %v705 = vld [vmem:[%s176 + $0x70] sm:$0xff]
          %v706 = vld [vmem:[%s176 + $0x78] sm:$0xff]
          %v707 = vld [vmem:[%s176 + $0x80] sm:$0xff]
          %v708 = vld [vmem:[%s176 + $0x88] sm:$0xff]
          %v709 = vld [vmem:[%s176 + $0x90] sm:$0xff]
          %v710 = vld [vmem:[%s176 + $0x98] sm:$0xff]
          %v711 = vld [vmem:[%s176 + $0xa0] sm:$0xff]
          %v712 = vld [vmem:[%s176 + $0xa8] sm:$0xff]
          %v713 = vld [vmem:[%s176 + $0xb0] sm:$0xff]
          %v714 = vld [vmem:[%s176 + $0xb8] sm:$0xff]
          %v715 = vld [vmem:[%s176 + $0xc0] sm:$0xff]
          %v716 = vld [vmem:[%s176 + $0xc8] sm:$0xff]
          %v717 = vld [vmem:[%s176 + $0xd0] sm:$0xff]
          %v718 = vld [vmem:[%s176 + $0xd8] sm:$0xff]
          %v719 = vld [vmem:[%s176 + $0xe0] sm:$0xff]
          %v720 = vld [vmem:[%s176 + $0xe8] sm:$0xff]
          %v721 = vld [vmem:[%s176 + $0xf0] sm:$0xff]
          %v722 = vld [vmem:[%s176 + $0xf8] sm:$0xff]
          %v723 = vld [vmem:[%s176 + $0x100] sm:$0xff]
          %v724 = vld [vmem:[%s176 + $0x108] sm:$0xff]
          %v725 = vld [vmem:[%s176 + $0x110] sm:$0xff]
          %v726 = vld [vmem:[%s176 + $0x118] sm:$0xff]
          %v727 = vld [vmem:[%s176 + $0x120] sm:$0xff]
          %v728 = vld [vmem:[%s176 + $0x128] sm:$0xff]
          %v729 = vld [vmem:[%s176 + $0x130] sm:$0xff]
          %v730 = vld [vmem:[%s176 + $0x138] sm:$0xff]
          %v731 = vsel %vm651, %v691, 0.0
          %v732 = vsel %vm652, %v692, 0.0
          %v733 = vsel %vm653, %v693, 0.0
          %v734 = vsel %vm654, %v694, 0.0
          %v735 = vsel %vm655, %v695, 0.0
          %v736 = vsel %vm656, %v696, 0.0
          %v737 = vsel %vm657, %v697, 0.0
          %v738 = vsel %vm658, %v698, 0.0
          %v739 = vsel %vm659, %v699, 0.0
          %v740 = vsel %vm660, %v700, 0.0
          %v741 = vsel %vm661, %v701, 0.0
          %v742 = vsel %vm662, %v702, 0.0
          %v743 = vsel %vm663, %v703, 0.0
          %v744 = vsel %vm664, %v704, 0.0
          %v745 = vsel %vm665, %v705, 0.0
          %v746 = vsel %vm666, %v706, 0.0
          %v747 = vsel %vm667, %v707, 0.0
          %v748 = vsel %vm668, %v708, 0.0
          %v749 = vsel %vm669, %v709, 0.0
          %v750 = vsel %vm670, %v710, 0.0
          %v751 = vsel %vm671, %v711, 0.0
          %v752 = vsel %vm672, %v712, 0.0
          %v753 = vsel %vm673, %v713, 0.0
          %v754 = vsel %vm674, %v714, 0.0
          %v755 = vsel %vm675, %v715, 0.0
          %v756 = vsel %vm676, %v716, 0.0
          %v757 = vsel %vm677, %v717, 0.0
          %v758 = vsel %vm678, %v718, 0.0
          %v759 = vsel %vm679, %v719, 0.0
          %v760 = vsel %vm680, %v720, 0.0
          %v761 = vsel %vm681, %v721, 0.0
          %v762 = vsel %vm682, %v722, 0.0
          %v763 = vsel %vm683, %v723, 0.0
          %v764 = vsel %vm684, %v724, 0.0
          %v765 = vsel %vm685, %v725, 0.0
          %v766 = vsel %vm686, %v726, 0.0
          %v767 = vsel %vm687, %v727, 0.0
          %v768 = vsel %vm688, %v728, 0.0
          %v769 = vsel %vm689, %v729, 0.0
          %v770 = vsel %vm690, %v730, 0.0
          %v771 = vld [vmem:[%s185] sm:$0xff]
          %v772 = vld [vmem:[%s185 + $0x8] sm:$0xff]
          %v773 = vld [vmem:[%s185 + $0x10] sm:$0xff]
          %v774 = vld [vmem:[%s185 + $0x18] sm:$0xff]
          %v775 = vld [vmem:[%s185 + $0x20] sm:$0xff]
          %v776 = vld [vmem:[%s185 + $0x28] sm:$0xff]
          %v777 = vld [vmem:[%s185 + $0x30] sm:$0xff]
          %v778 = vld [vmem:[%s185 + $0x38] sm:$0xff]
          %v779 = vld [vmem:[%s185 + $0x40] sm:$0xff]
          %v780 = vld [vmem:[%s185 + $0x48] sm:$0xff]
          %v781 = vld [vmem:[%s185 + $0x50] sm:$0xff]
          %v782 = vld [vmem:[%s185 + $0x58] sm:$0xff]
          %v783 = vld [vmem:[%s185 + $0x60] sm:$0xff]
          %v784 = vld [vmem:[%s185 + $0x68] sm:$0xff]
          %v785 = vld [vmem:[%s185 + $0x70] sm:$0xff]
          %v786 = vld [vmem:[%s185 + $0x78] sm:$0xff]
          %v787 = vld [vmem:[%s185 + $0x80] sm:$0xff]
          %v788 = vld [vmem:[%s185 + $0x88] sm:$0xff]
          %v789 = vld [vmem:[%s185 + $0x90] sm:$0xff]
          %v790 = vld [vmem:[%s185 + $0x98] sm:$0xff]
          %v791 = vld [vmem:[%s185 + $0xa0] sm:$0xff]
          %v792 = vld [vmem:[%s185 + $0xa8] sm:$0xff]
          %v793 = vld [vmem:[%s185 + $0xb0] sm:$0xff]
          %v794 = vld [vmem:[%s185 + $0xb8] sm:$0xff]
          %v795 = vld [vmem:[%s185 + $0xc0] sm:$0xff]
          %v796 = vld [vmem:[%s185 + $0xc8] sm:$0xff]
          %v797 = vld [vmem:[%s185 + $0xd0] sm:$0xff]
          %v798 = vld [vmem:[%s185 + $0xd8] sm:$0xff]
          %v799 = vld [vmem:[%s185 + $0xe0] sm:$0xff]
          %v800 = vld [vmem:[%s185 + $0xe8] sm:$0xff]
          %v801 = vld [vmem:[%s185 + $0xf0] sm:$0xff]
          %v802 = vld [vmem:[%s185 + $0xf8] sm:$0xff]
          %v803 = vld [vmem:[%s185 + $0x100] sm:$0xff]
          %v804 = vld [vmem:[%s185 + $0x108] sm:$0xff]
          %v805 = vld [vmem:[%s185 + $0x110] sm:$0xff]
          %v806 = vld [vmem:[%s185 + $0x118] sm:$0xff]
          %v807 = vld [vmem:[%s185 + $0x120] sm:$0xff]
          %v808 = vld [vmem:[%s185 + $0x128] sm:$0xff]
          %v809 = vld [vmem:[%s185 + $0x130] sm:$0xff]
          %v810 = vld [vmem:[%s185 + $0x138] sm:$0xff]
          %v811 = vsel %vm651, %v771, 0.0
          %v812 = vsel %vm652, %v772, 0.0
          %v813 = vsel %vm653, %v773, 0.0
          %v814 = vsel %vm654, %v774, 0.0
          %v815 = vsel %vm655, %v775, 0.0
          %v816 = vsel %vm656, %v776, 0.0
          %v817 = vsel %vm657, %v777, 0.0
          %v818 = vsel %vm658, %v778, 0.0
          %v819 = vsel %vm659, %v779, 0.0
          %v820 = vsel %vm660, %v780, 0.0
          %v821 = vsel %vm661, %v781, 0.0
          %v822 = vsel %vm662, %v782, 0.0
          %v823 = vsel %vm663, %v783, 0.0
          %v824 = vsel %vm664, %v784, 0.0
          %v825 = vsel %vm665, %v785, 0.0
          %v826 = vsel %vm666, %v786, 0.0
          %v827 = vsel %vm667, %v787, 0.0
          %v828 = vsel %vm668, %v788, 0.0
          %v829 = vsel %vm669, %v789, 0.0
          %v830 = vsel %vm670, %v790, 0.0
          %v831 = vsel %vm671, %v791, 0.0
          %v832 = vsel %vm672, %v792, 0.0
          %v833 = vsel %vm673, %v793, 0.0
          %v834 = vsel %vm674, %v794, 0.0
          %v835 = vsel %vm675, %v795, 0.0
          %v836 = vsel %vm676, %v796, 0.0
          %v837 = vsel %vm677, %v797, 0.0
          %v838 = vsel %vm678, %v798, 0.0
          %v839 = vsel %vm679, %v799, 0.0
          %v840 = vsel %vm680, %v800, 0.0
          %v841 = vsel %vm681, %v801, 0.0
          %v842 = vsel %vm682, %v802, 0.0
          %v843 = vsel %vm683, %v803, 0.0
          %v844 = vsel %vm684, %v804, 0.0
          %v845 = vsel %vm685, %v805, 0.0
          %v846 = vsel %vm686, %v806, 0.0
          %v847 = vsel %vm687, %v807, 0.0
          %v848 = vsel %vm688, %v808, 0.0
          %v849 = vsel %vm689, %v809, 0.0
          %v850 = vsel %vm690, %v810, 0.0
          %v851 = vsub.f32 1.0, %v731
          %v852 = vsub.f32 1.0, %v732
          %v853 = vsub.f32 1.0, %v733
          %v854 = vsub.f32 1.0, %v734
          %v855 = vsub.f32 1.0, %v735
          %v856 = vsub.f32 1.0, %v736
          %v857 = vsub.f32 1.0, %v737
          %v858 = vsub.f32 1.0, %v738
          %v859 = vsub.f32 1.0, %v739
          %v860 = vsub.f32 1.0, %v740
          %v861 = vsub.f32 1.0, %v741
          %v862 = vsub.f32 1.0, %v742
          %v863 = vsub.f32 1.0, %v743
          %v864 = vsub.f32 1.0, %v744
          %v865 = vsub.f32 1.0, %v745
          %v866 = vsub.f32 1.0, %v746
          %v867 = vsub.f32 1.0, %v747
          %v868 = vsub.f32 1.0, %v748
          %v869 = vsub.f32 1.0, %v749
          %v870 = vsub.f32 1.0, %v750
          %v871 = vsub.f32 1.0, %v751
          %v872 = vsub.f32 1.0, %v752
          %v873 = vsub.f32 1.0, %v753
          %v874 = vsub.f32 1.0, %v754
          %v875 = vsub.f32 1.0, %v755
          %v876 = vsub.f32 1.0, %v756
          %v877 = vsub.f32 1.0, %v757
          %v878 = vsub.f32 1.0, %v758
          %v879 = vsub.f32 1.0, %v759
          %v880 = vsub.f32 1.0, %v760
          %v881 = vsub.f32 1.0, %v761
          %v882 = vsub.f32 1.0, %v762
          %v883 = vsub.f32 1.0, %v763
          %v884 = vsub.f32 1.0, %v764
          %v885 = vsub.f32 1.0, %v765
          %v886 = vsub.f32 1.0, %v766
          %v887 = vsub.f32 1.0, %v767
          %v888 = vsub.f32 1.0, %v768
          %v889 = vsub.f32 1.0, %v769
          %v890 = vsub.f32 1.0, %v770
          %v891 = vmax.f32 %v851, 0.0
          %v892 = vmax.f32 %v852, 0.0
          %v893 = vmax.f32 %v853, 0.0
          %v894 = vmax.f32 %v854, 0.0
          %v895 = vmax.f32 %v855, 0.0
          %v896 = vmax.f32 %v856, 0.0
          %v897 = vmax.f32 %v857, 0.0
          %v898 = vmax.f32 %v858, 0.0
          %v899 = vmax.f32 %v859, 0.0
          %v900 = vmax.f32 %v860, 0.0
          %v901 = vmax.f32 %v861, 0.0
          %v902 = vmax.f32 %v862, 0.0
          %v903 = vmax.f32 %v863, 0.0
          %v904 = vmax.f32 %v864, 0.0
          %v905 = vmax.f32 %v865, 0.0
          %v906 = vmax.f32 %v866, 0.0
          %v907 = vmax.f32 %v867, 0.0
          %v908 = vmax.f32 %v868, 0.0
          %v909 = vmax.f32 %v869, 0.0
          %v910 = vmax.f32 %v870, 0.0
          %v911 = vmax.f32 %v871, 0.0
          %v912 = vmax.f32 %v872, 0.0
          %v913 = vmax.f32 %v873, 0.0
          %v914 = vmax.f32 %v874, 0.0
          %v915 = vmax.f32 %v875, 0.0
          %v916 = vmax.f32 %v876, 0.0
          %v917 = vmax.f32 %v877, 0.0
          %v918 = vmax.f32 %v878, 0.0
          %v919 = vmax.f32 %v879, 0.0
          %v920 = vmax.f32 %v880, 0.0
          %v921 = vmax.f32 %v881, 0.0
          %v922 = vmax.f32 %v882, 0.0
          %v923 = vmax.f32 %v883, 0.0
          %v924 = vmax.f32 %v884, 0.0
          %v925 = vmax.f32 %v885, 0.0
          %v926 = vmax.f32 %v886, 0.0
          %v927 = vmax.f32 %v887, 0.0
          %v928 = vmax.f32 %v888, 0.0
          %v929 = vmax.f32 %v889, 0.0
          %v930 = vmax.f32 %v890, 0.0
          %v931 = vadd.f32 %v891, %v892
          %v932 = vadd.f32 %v931, %v893
          %v933 = vadd.f32 %v932, %v894
          %v934 = vadd.f32 %v933, %v895
          %v935 = vadd.f32 %v934, %v896
          %v936 = vadd.f32 %v935, %v897
          %v937 = vadd.f32 %v936, %v898
          %v938 = vadd.f32 %v937, %v899
          %v939 = vadd.f32 %v938, %v900
          %v940 = vadd.f32 %v939, %v901
          %v941 = vadd.f32 %v940, %v902
          %v942 = vadd.f32 %v941, %v903
          %v943 = vadd.f32 %v942, %v904
          %v944 = vadd.f32 %v943, %v905
          %v945 = vadd.f32 %v944, %v906
          %v946 = vadd.f32 %v945, %v907
          %v947 = vadd.f32 %v946, %v908
          %v948 = vadd.f32 %v947, %v909
          %v949 = vadd.f32 %v948, %v910
          %v950 = vadd.f32 %v949, %v911
          %v951 = vadd.f32 %v950, %v912
          %v952 = vadd.f32 %v951, %v913
          %v953 = vadd.f32 %v952, %v914
          %v954 = vadd.f32 %v953, %v915
          %v955 = vadd.f32 %v954, %v916
          %v956 = vadd.f32 %v955, %v917
          %v957 = vadd.f32 %v956, %v918
          %v958 = vadd.f32 %v957, %v919
          %v959 = vadd.f32 %v958, %v920
          %v960 = vadd.f32 %v959, %v921
          %v961 = vadd.f32 %v960, %v922
          %v962 = vadd.f32 %v961, %v923
          %v963 = vadd.f32 %v962, %v924
          %v964 = vadd.f32 %v963, %v925
          %v965 = vadd.f32 %v964, %v926
          %v966 = vadd.f32 %v965, %v927
          %v967 = vadd.f32 %v966, %v928
          %v968 = vadd.f32 %v967, %v929
          %v969 = vadd.f32 %v968, %v930
          %v970 = vrot.slane %v969, 4
          %v971 = vadd.f32 %v969, %v970
          %v972 = vrot.slane %v971, 2
          %v973 = vadd.f32 %v971, %v972
          %v974 = vrot.slane %v973, 1
          %v975 = vadd.f32 %v973, %v974
          %976 = vst [vmem:[%s223] sm:$0x1] %v975
          %v977 = vadd.f32 %v811, 1.0
          %v978 = vadd.f32 %v812, 1.0
          %v979 = vadd.f32 %v813, 1.0
          %v980 = vadd.f32 %v814, 1.0
          %v981 = vadd.f32 %v815, 1.0
          %v982 = vadd.f32 %v816, 1.0
          %v983 = vadd.f32 %v817, 1.0
          %v984 = vadd.f32 %v818, 1.0
          %v985 = vadd.f32 %v819, 1.0
          %v986 = vadd.f32 %v820, 1.0
          %v987 = vadd.f32 %v821, 1.0
          %v988 = vadd.f32 %v822, 1.0
          %v989 = vadd.f32 %v823, 1.0
          %v990 = vadd.f32 %v824, 1.0
          %v991 = vadd.f32 %v825, 1.0
          %v992 = vadd.f32 %v826, 1.0
          %v993 = vadd.f32 %v827, 1.0
          %v994 = vadd.f32 %v828, 1.0
          %v995 = vadd.f32 %v829, 1.0
          %v996 = vadd.f32 %v830, 1.0
          %v997 = vadd.f32 %v831, 1.0
          %v998 = vadd.f32 %v832, 1.0
          %v999 = vadd.f32 %v833, 1.0
          %v1000 = vadd.f32 %v834, 1.0
          %v1001 = vadd.f32 %v835, 1.0
          %v1002 = vadd.f32 %v836, 1.0
          %v1003 = vadd.f32 %v837, 1.0
          %v1004 = vadd.f32 %v838, 1.0
          %v1005 = vadd.f32 %v839, 1.0
          %v1006 = vadd.f32 %v840, 1.0
          %v1007 = vadd.f32 %v841, 1.0
          %v1008 = vadd.f32 %v842, 1.0
          %v1009 = vadd.f32 %v843, 1.0
          %v1010 = vadd.f32 %v844, 1.0
          %v1011 = vadd.f32 %v845, 1.0
          %v1012 = vadd.f32 %v846, 1.0
          %v1013 = vadd.f32 %v847, 1.0
          %v1014 = vadd.f32 %v848, 1.0
          %v1015 = vadd.f32 %v849, 1.0
          %v1016 = vadd.f32 %v850, 1.0
          %v1017 = vmax.f32 %v977, 0.0
          %v1018 = vmax.f32 %v978, 0.0
          %v1019 = vmax.f32 %v979, 0.0
          %v1020 = vmax.f32 %v980, 0.0
          %v1021 = vmax.f32 %v981, 0.0
          %v1022 = vmax.f32 %v982, 0.0
          %v1023 = vmax.f32 %v983, 0.0
          %v1024 = vmax.f32 %v984, 0.0
          %v1025 = vmax.f32 %v985, 0.0
          %v1026 = vmax.f32 %v986, 0.0
          %v1027 = vmax.f32 %v987, 0.0
          %v1028 = vmax.f32 %v988, 0.0
          %v1029 = vmax.f32 %v989, 0.0
          %v1030 = vmax.f32 %v990, 0.0
          %v1031 = vmax.f32 %v991, 0.0
          %v1032 = vmax.f32 %v992, 0.0
          %v1033 = vmax.f32 %v993, 0.0
          %v1034 = vmax.f32 %v994, 0.0
          %v1035 = vmax.f32 %v995, 0.0
          %v1036 = vmax.f32 %v996, 0.0
          %v1037 = vmax.f32 %v997, 0.0
          %v1038 = vmax.f32 %v998, 0.0
          %v1039 = vmax.f32 %v999, 0.0
          %v1040 = vmax.f32 %v1000, 0.0
          %v1041 = vmax.f32 %v1001, 0.0
          %v1042 = vmax.f32 %v1002, 0.0
          %v1043 = vmax.f32 %v1003, 0.0
          %v1044 = vmax.f32 %v1004, 0.0
          %v1045 = vmax.f32 %v1005, 0.0
          %v1046 = vmax.f32 %v1006, 0.0
          %v1047 = vmax.f32 %v1007, 0.0
          %v1048 = vmax.f32 %v1008, 0.0
          %v1049 = vmax.f32 %v1009, 0.0
          %v1050 = vmax.f32 %v1010, 0.0
          %v1051 = vmax.f32 %v1011, 0.0
          %v1052 = vmax.f32 %v1012, 0.0
          %v1053 = vmax.f32 %v1013, 0.0
          %v1054 = vmax.f32 %v1014, 0.0
          %v1055 = vmax.f32 %v1015, 0.0
          %v1056 = vmax.f32 %v1016, 0.0
          %v1057 = vadd.f32 %v1017, %v1018
          %v1058 = vadd.f32 %v1057, %v1019
          %v1059 = vadd.f32 %v1058, %v1020
          %v1060 = vadd.f32 %v1059, %v1021
          %v1061 = vadd.f32 %v1060, %v1022
          %v1062 = vadd.f32 %v1061, %v1023
          %v1063 = vadd.f32 %v1062, %v1024
          %v1064 = vadd.f32 %v1063, %v1025
          %v1065 = vadd.f32 %v1064, %v1026
          %v1066 = vadd.f32 %v1065, %v1027
          %v1067 = vadd.f32 %v1066, %v1028
          %v1068 = vadd.f32 %v1067, %v1029
          %v1069 = vadd.f32 %v1068, %v1030
          %v1070 = vadd.f32 %v1069, %v1031
          %v1071 = vadd.f32 %v1070, %v1032
          %v1072 = vadd.f32 %v1071, %v1033
          %v1073 = vadd.f32 %v1072, %v1034
          %v1074 = vadd.f32 %v1073, %v1035
          %v1075 = vadd.f32 %v1074, %v1036
          %v1076 = vadd.f32 %v1075, %v1037
          %v1077 = vadd.f32 %v1076, %v1038
          %v1078 = vadd.f32 %v1077, %v1039
          %v1079 = vadd.f32 %v1078, %v1040
          %v1080 = vadd.f32 %v1079, %v1041
          %v1081 = vadd.f32 %v1080, %v1042
          %v1082 = vadd.f32 %v1081, %v1043
          %v1083 = vadd.f32 %v1082, %v1044
          %v1084 = vadd.f32 %v1083, %v1045
          %v1085 = vadd.f32 %v1084, %v1046
          %v1086 = vadd.f32 %v1085, %v1047
          %v1087 = vadd.f32 %v1086, %v1048
          %v1088 = vadd.f32 %v1087, %v1049
          %v1089 = vadd.f32 %v1088, %v1050
          %v1090 = vadd.f32 %v1089, %v1051
          %v1091 = vadd.f32 %v1090, %v1052
          %v1092 = vadd.f32 %v1091, %v1053
          %v1093 = vadd.f32 %v1092, %v1054
          %v1094 = vadd.f32 %v1093, %v1055
          %v1095 = vadd.f32 %v1094, %v1056
          %v1096 = vrot.slane %v1095, 4
          %v1097 = vadd.f32 %v1095, %v1096
          %v1098 = vrot.slane %v1097, 2
          %v1099 = vadd.f32 %v1097, %v1098
          %v1100 = vrot.slane %v1099, 1
          %v1101 = vadd.f32 %v1099, %v1100
          %1102 = vst [vmem:[%s223 + $0x1] sm:$0x1] %v1101
          %v1103 = vadd.f32 %v811, %v812
          %v1104 = vadd.f32 %v1103, %v813
          %v1105 = vadd.f32 %v1104, %v814
          %v1106 = vadd.f32 %v1105, %v815
          %v1107 = vadd.f32 %v1106, %v816
          %v1108 = vadd.f32 %v1107, %v817
          %v1109 = vadd.f32 %v1108, %v818
          %v1110 = vadd.f32 %v1109, %v819
          %v1111 = vadd.f32 %v1110, %v820
          %v1112 = vadd.f32 %v1111, %v821
          %v1113 = vadd.f32 %v1112, %v822
          %v1114 = vadd.f32 %v1113, %v823
          %v1115 = vadd.f32 %v1114, %v824
          %v1116 = vadd.f32 %v1115, %v825
          %v1117 = vadd.f32 %v1116, %v826
          %v1118 = vadd.f32 %v1117, %v827
          %v1119 = vadd.f32 %v1118, %v828
          %v1120 = vadd.f32 %v1119, %v829
          %v1121 = vadd.f32 %v1120, %v830
          %v1122 = vadd.f32 %v1121, %v831
          %v1123 = vadd.f32 %v1122, %v832
          %v1124 = vadd.f32 %v1123, %v833
          %v1125 = vadd.f32 %v1124, %v834
          %v1126 = vadd.f32 %v1125, %v835
          %v1127 = vadd.f32 %v1126, %v836
          %v1128 = vadd.f32 %v1127, %v837
          %v1129 = vadd.f32 %v1128, %v838
          %v1130 = vadd.f32 %v1129, %v839
          %v1131 = vadd.f32 %v1130, %v840
          %v1132 = vadd.f32 %v1131, %v841
          %v1133 = vadd.f32 %v1132, %v842
          %v1134 = vadd.f32 %v1133, %v843
          %v1135 = vadd.f32 %v1134, %v844
          %v1136 = vadd.f32 %v1135, %v845
          %v1137 = vadd.f32 %v1136, %v846
          %v1138 = vadd.f32 %v1137, %v847
          %v1139 = vadd.f32 %v1138, %v848
          %v1140 = vadd.f32 %v1139, %v849
          %v1141 = vadd.f32 %v1140, %v850
          %v1142 = vrot.slane %v1141, 4
          %v1143 = vadd.f32 %v1141, %v1142
          %v1144 = vrot.slane %v1143, 2
          %v1145 = vadd.f32 %v1143, %v1144
          %v1146 = vrot.slane %v1145, 1
          %v1147 = vadd.f32 %v1145, %v1146
          %1148 = vst [vmem:[%s223 + $0x2] sm:$0x1] %v1147
        $region44: #{tpu_custom_call.1} parent=27 // pred_fallthru
          _
        %p1149 = scmp.lt.s32.totalorder %s19, 1
        %s1150 = scalar_select %p1149, %s19, 1
        %s1151 = smul.addr %s1150, 4
        %s1152 = scalar_lea.vmem %s2, %s1151
        // Predicated region
        $region45: #{tpu_custom_call.1} parent=27 // pred_check
          %p1153 = pneg %p89
        $region46: #{tpu_custom_call.1} parent=27 // pred_check_branch
          %1155 = sbr.rel (%p1153) target = $region48
        $region47: #{tpu_custom_call.1} parent=27 // pred_region
          _
        $region48: #{tpu_custom_call.1} parent=27 // pred_fallthru
          _
      $region28: #{tpu_custom_call.1} parent=5 // pred_fallthru
        _
      %p1156 = scmp.le.s32.totalorder 2, %s14
      // Predicated region
      $region49: #{tpu_custom_call.1} parent=5 // pred_check
        %p1157 = pneg %p1156
      $region50: #{tpu_custom_call.1} parent=5 // pred_check_branch
        %1159 = sbr.rel (%p1157) target = $region52
      $region51: #{tpu_custom_call.1} parent=5 // pred_region
        %s1160 = ssub.s32 %s14, 2
        // Predicated region
        $region53: #{tpu_custom_call.1} parent=51 // pred_check
          %p1161 = pneg %p95
        $region54: #{tpu_custom_call.1} parent=51 // pred_check_branch
          %1163 = sbr.rel (%p1161) target = $region56
        $region55: #{tpu_custom_call.1} parent=51 // pred_region
          %p1164 = scmp.lt.s32.totalorder %s20, 1
          %s1165 = scalar_select %p1164, %s20, 1
          %s1166 = smul.addr %s1165, 4
          %s1167 = scalar_lea.vmem %s2, %s1166
        $region56: #{tpu_custom_call.1} parent=51 // pred_fallthru
          _
      $region52: #{tpu_custom_call.1} parent=5 // pred_fallthru
        _
    $region6: #{tpu_custom_call.1} parent=1 // loop_footer
      %s18 = sadd.s32 1, %s14
    $region7: #{tpu_custom_call.1} parent=1 // loop_footer_branch
      %13 = sbr.rel target = $region3
    $region8: #{tpu_custom_call.1} parent=1 // loop_exit
      _
    %1168 = vsyncpa [#allocation3], 1
    %s1169 = scalar_lea.sflag [#allocation3], 1
    %1170 = vsyncpa %s1169, 1
    %1171 = vsyncpa [#allocation5], 1
    %s1172 = scalar_lea.sflag [#allocation5], 1
    %1173 = vsyncpa %s1172, 1

</llo_original>
